<compile_context>
chip_gen: v7x
topology: tpu7x:2x2x1
jax: 0.10.0
libtpu: 0.0.40
codegen_flags: <defaults>
</compile_context>

<pallas_src>
import functools

import jax
import jax.numpy as jnp
from jax import lax
from jax.experimental import pallas as pl
from jax.experimental.pallas import tpu as pltpu


# ---------------------------------------------------------------------------
# VMEM sizing helpers (per-generation)
# ---------------------------------------------------------------------------
def _vmem_capacity_bytes():
    try:
        return int(pltpu.get_tpu_info().vmem_capacity_bytes)
    except Exception:
        return 64 * 1024 * 1024  # conservative fallback (v7x physical VMEM)


def _vmem_budget_and_limit():
    cap = _vmem_capacity_bytes()
    budget = (cap * 3) // 5                       # ~60%: ~76 MiB v5e/v6e, ~38 MiB v7x
    limit = min((cap * 3) // 4, 100 * 1024 * 1024)  # ~96 MiB v5e/v6e, ~48 MiB v7x
    return budget, limit


def _pick_tiles(n, hw, c_in, c_out, in_item, out_item, cd_item, budget):
    """Pick (batch_tile, spatial_tile) so the double-buffered working set fits.

    Per spatial column: 2x input block (input dtype) + 2x output block (OUTPUT
    dtype), plus the in-kernel compute-dtype copy of x and the f32 MXU result.
    """
    per_col = (2 * c_in * in_item
               + 2 * c_out * out_item
               + c_in * cd_item
               + c_out * 4)
    avail = max(budget - c_out * c_in * 4, per_col * 128)
    max_cols = max(128, avail // per_col)

    if hw > max_cols:
        # Spatial tiling: lane-dense (multiple of 128) so stores stay unmasked.
        return 1, max(128, (max_cols // 128) * 128)

    # Whole image fits one lane-dense block: pack several images per grid step
    # to amortize per-step overhead, but keep >=2 grid steps for v7x's 2 TCs.
    t_s = hw
    t_b = max(1, min(n, max_cols // max(hw, 1), 8))
    if n >= 2:
        t_b = min(t_b, (n + 1) // 2)
    elif hw >= 256:
        t_s = max(128, ((hw // 2) // 128) * 128)   # n == 1: split spatially instead
    return t_b, t_s


# ---------------------------------------------------------------------------
# 1x1 convolution (the BasicBlock default): out[n] = W @ x[n]  on the MXU
# ---------------------------------------------------------------------------
def _conv1x1_kernel(w_ref, x_ref, o_ref, *, t_b, compute_dtype):
    # w_ref: (C_out, C_in) resident weights
    # x_ref: (t_b, C_in, t_s) input block ; o_ref: (t_b, C_out, t_s) output block
    w = w_ref[...]
    for b in range(t_b):                      # static unroll over the batch tile
        xb = x_ref[b]
        if compute_dtype is not None:
            xb = xb.astype(compute_dtype)     # cast in VMEM (free VPU filler), not in XLA
        o_ref[b] = jnp.dot(w, xb, preferred_element_type=jnp.float32).astype(o_ref.dtype)


def conv2d_1x1_nobias_pallas(x_nchw, weight_oi, *, compute_dtype=None, out_dtype=None):
    """1x1 Conv2d(C_in -> C_out, bias=False), stride 1, NCHW in / NCHW out."""
    n, c_in, h, w = x_nchw.shape
    c_out, c_in_w = weight_oi.shape
    assert c_in == c_in_w
    hw = h * w
    out_dtype = x_nchw.dtype if out_dtype is None else out_dtype

    x3d = x_nchw.reshape(n, c_in, hw)          # contiguous trailing-dim merge: free
    w2d = weight_oi if compute_dtype is None else weight_oi.astype(compute_dtype)

    in_item = jnp.dtype(x3d.dtype).itemsize
    out_item = jnp.dtype(out_dtype).itemsize
    cd_item = jnp.dtype(compute_dtype).itemsize if compute_dtype is not None else 0

    budget, vmem_limit = _vmem_budget_and_limit()
    t_b, t_s = _pick_tiles(n, hw, c_in, c_out, in_item, out_item, cd_item, budget)
    b_tiles = pl.cdiv(n, t_b)
    s_tiles = pl.cdiv(hw, t_s)

    kernel = functools.partial(_conv1x1_kernel, t_b=t_b, compute_dtype=compute_dtype)
    cost = pl.CostEstimate(
        flops=2 * n * c_out * c_in * hw,
        transcendentals=0,
        bytes_accessed=int(x3d.size) * in_item
        + int(w2d.size) * jnp.dtype(w2d.dtype).itemsize
        + n * c_out * hw * out_item,
    )

    # NOTE: pipeline_mode=pl.Buffered(3) on the x spec is a possible v7x-only
    # tweak; omitted here to keep VMEM headroom and portability.
    out3d = pl.pallas_call(
        kernel,
        out_shape=jax.ShapeDtypeStruct((n, c_out, hw), out_dtype),
        grid_spec=pltpu.PrefetchScalarGridSpec(
            num_scalar_prefetch=0,
            grid=(b_tiles, s_tiles),
            in_specs=[
                pl.BlockSpec((c_out, c_in), lambda b, s: (0, 0)),        # resident weights
                pl.BlockSpec((t_b, c_in, t_s), lambda b, s: (b, 0, s)),  # input columns
            ],
            out_specs=pl.BlockSpec((t_b, c_out, t_s), lambda b, s: (b, 0, s)),
        ),
        compiler_params=pltpu.CompilerParams(
            dimension_semantics=("parallel", "parallel"),
            vmem_limit_bytes=int(vmem_limit),
        ),
        cost_estimate=cost,
    )(w2d, x3d)

    return out3d.reshape(n, c_out, h, w)


# ---------------------------------------------------------------------------
# k>1 convolution: single fused pallas_call, f32 in-kernel tap accumulation
# ---------------------------------------------------------------------------
def _convk_kernel(w_ref, x_ref, o_ref, *, kh, kw, h_out, w_out, compute_dtype):
    # w_ref: (kh*kw, C_out, C_in) ; x_ref: (H, C_in, W) ; o_ref: (H_out, C_out, W_out)
    c_out = o_ref.shape[1]

    taps = []
    for t in range(kh * kw):                  # hoisted: cast weights once per block
        wt = w_ref[t]
        if compute_dtype is not None:
            wt = wt.astype(compute_dtype)
        taps.append(wt)

    def row_body(y, carry):
        acc = jnp.zeros((c_out, w_out), jnp.float32)
        for t in range(kh * kw):              # static tap loop, f32 accumulation
            dy, dx = t // kw, t % kw
            xrow = x_ref[y + dy]              # (C_in, W): dynamic untiled leading index
            if compute_dtype is not None:
                xrow = xrow.astype(compute_dtype)
            xs = xrow[:, dx:dx + w_out]       # static lane window for this tap
            acc = acc + jnp.dot(taps[t], xs, preferred_element_type=jnp.float32)
        o_ref[y] = acc.astype(o_ref.dtype)    # each output row written exactly once
        return carry

    lax.fori_loop(0, h_out, row_body, 0)


def conv2d_kxk_nobias_pallas(x_nchw, weight, *, compute_dtype=None, out_dtype=None):
    """kxk Conv2d (bias=False, stride 1, padding 0) as one fused pallas_call."""
    c_out, c_in, kh, kw = weight.shape
    n, _, h, w = x_nchw.shape
    h_out, w_out = h - kh + 1, w - kw + 1
    out_dtype = x_nchw.dtype if out_dtype is None else out_dtype

    # One cheap layout pass (NCHW -> NHCW) replaces the old kh*kw hidden HBM
    # slice copies and kh*kw full input re-reads; the kernel then reads the
    # image from HBM exactly once.
    x_nhcw = jnp.transpose(x_nchw, (0, 2, 1, 3))
    w_taps = jnp.transpose(weight, (2, 3, 0, 1)).reshape(kh * kw, c_out, c_in)
    if compute_dtype is not None:
        w_taps = w_taps.astype(compute_dtype)

    _, vmem_limit = _vmem_budget_and_limit()
    kernel = functools.partial(_convk_kernel, kh=kh, kw=kw, h_out=h_out,
                               w_out=w_out, compute_dtype=compute_dtype)

    in_item = jnp.dtype(x_nhcw.dtype).itemsize
    out_item = jnp.dtype(out_dtype).itemsize
    cost = pl.CostEstimate(
        flops=2 * n * c_out * c_in * h_out * w_out * kh * kw,
        transcendentals=0,
        bytes_accessed=int(x_nhcw.size) * in_item
        + int(w_taps.size) * jnp.dtype(w_taps.dtype).itemsize
        + n * h_out * c_out * w_out * out_item,
    )

    out_nhcw = pl.pallas_call(
        kernel,
        out_shape=jax.ShapeDtypeStruct((n, h_out, c_out, w_out), out_dtype),
        grid_spec=pltpu.PrefetchScalarGridSpec(
            num_scalar_prefetch=0,
            grid=(n,),
            in_specs=[
                pl.BlockSpec((kh * kw, c_out, c_in), lambda b: (0, 0, 0)),
                pl.BlockSpec((None, h, c_in, w), lambda b: (b, 0, 0, 0)),
            ],
            out_specs=pl.BlockSpec((None, h_out, c_out, w_out), lambda b: (b, 0, 0, 0)),
        ),
        compiler_params=pltpu.CompilerParams(
            dimension_semantics=("parallel",),
            vmem_limit_bytes=int(vmem_limit),
        ),
        cost_estimate=cost,
    )(w_taps, x_nhcw)

    # TODO(synk): tile H with a (kh-1)-row halo (manual DMA) so a whole image
    # never has to fit in VMEM, and emit NCHW directly to drop this transpose.
    return jnp.transpose(out_nhcw, (0, 2, 1, 3))


def conv2d_nobias_pallas(x_nchw, weight, *, compute_dtype=None, out_dtype=None):
    """Conv2d(inplanes, planes, kernel_size=k, bias=False), stride 1, padding 0."""
    c_out, c_in, kh, kw = weight.shape
    n, c_in_x, h, w = x_nchw.shape
    assert c_in == c_in_x
    if kh == 1 and kw == 1:
        return conv2d_1x1_nobias_pallas(x_nchw, weight[:, :, 0, 0],
                                        compute_dtype=compute_dtype, out_dtype=out_dtype)
    return conv2d_kxk_nobias_pallas(x_nchw, weight,
                                    compute_dtype=compute_dtype, out_dtype=out_dtype)


class BasicBlockPallas:
    """JAX/Pallas equivalent of BasicBlock(inplanes, planes, kernel_size)."""

    def __init__(self, inplanes, planes, kernel_size=1, *, key):
        fan_in = inplanes * kernel_size * kernel_size
        bound = (1.0 / fan_in) ** 0.5
        self.weight = jax.random.uniform(
            key, (planes, inplanes, kernel_size, kernel_size),
            minval=-bound, maxval=bound, dtype=jnp.float32,
        )

    def __call__(self, x_nchw, *, compute_dtype=None, out_dtype=None):
        # compute_dtype=jnp.bfloat16 casts blocks in VMEM (bf16 MXU rate, f32
        # accumulation, no extra HBM pass); out_dtype=jnp.bfloat16 halves
        # output HBM traffic if the consumer accepts it. Defaults = f32 parity.
        return conv2d_nobias_pallas(x_nchw, self.weight,
                                    compute_dtype=compute_dtype, out_dtype=out_dtype)


if __name__ == "__main__":
    key = jax.random.PRNGKey(0)
    k_w1, k_w3, k_x = jax.random.split(key, 3)

    batch, inplanes, planes, spatial = 2, 4, 8, 16
    x = jax.random.normal(k_x, (batch, inplanes, spatial, spatial), jnp.float32)

    # --- default BasicBlock: kernel_size=1 ---
    block1 = BasicBlockPallas(inplanes, planes, kernel_size=1, key=k_w1)
    out1 = jax.block_until_ready(block1(x))
    ref1 = jax.lax.conv_general_dilated(
        x, block1.weight, window_strides=(1, 1), padding="VALID",
        dimension_numbers=("NCHW", "OIHW", "NCHW"))
    assert out1.shape == (batch, planes, spatial, spatial), out1.shape
    assert jnp.allclose(out1, ref1, atol=1e-5, rtol=1e-5), float(
        jnp.max(jnp.abs(out1 - ref1)))

    # --- fused kernel_size=3 path (single pallas_call, f32 tap accumulation) ---
    block3 = BasicBlockPallas(inplanes, planes, kernel_size=3, key=k_w3)
    out3 = jax.block_until_ready(block3(x))
    ref3 = jax.lax.conv_general_dilated(
        x, block3.weight, window_strides=(1, 1), padding="VALID",
        dimension_numbers=("NCHW", "OIHW", "NCHW"))
    assert out3.shape == (batch, planes, spatial - 2, spatial - 2), out3.shape
    assert jnp.allclose(out3, ref3, atol=1e-5, rtol=1e-5), float(
        jnp.max(jnp.abs(out3 - ref3)))

    print("KERNEL_OK")
</pallas_src>

<mosaic_0001>
module attributes {stable_mosaic.version = 11 : i64} {
  func.func @_conv1x1_kernel(%arg0: i32, %arg1: i32, %arg2: memref<8x4xf32, #tpu.memory_space<vmem>>, %arg3: memref<1x4x256xf32, #tpu.memory_space<vmem>>, %arg4: memref<1x8x256xf32, #tpu.memory_space<vmem>>) attributes {dimension_semantics = [#tpu.dimension_semantics<parallel>, #tpu.dimension_semantics<parallel>], iteration_bounds = array<i64: 2, 1>, scalar_prefetch = 0 : i64, scratch_operands = 0 : i64, tpu.core_type = #tpu.core_type<tc>, window_params = [{pipeline_mode = #tpu.pipeline_mode<synchronous>, transform_indices = @transform_0, window_bounds = array<i64: 8, 4>}, {transform_indices = @transform_1, window_bounds = array<i64: 1, 4, 256>}, {transform_indices = @transform_2, window_bounds = array<i64: 1, 8, 256>}]} {
    %c0 = arith.constant 0 : index
    %c0_0 = arith.constant 0 : index
    %0 = vector.load %arg2[%c0, %c0_0] : memref<8x4xf32, #tpu.memory_space<vmem>>, vector<8x4xf32>
    %c0_1 = arith.constant 0 : index
    %c0_2 = arith.constant 0 : index
    %c0_3 = arith.constant 0 : index
    %1 = vector.load %arg3[%c0_1, %c0_2, %c0_3] : memref<1x4x256xf32, #tpu.memory_space<vmem>>, vector<1x4x256xf32>
    %2 = vector.shape_cast %1 : vector<1x4x256xf32> to vector<4x256xf32>
    %cst = arith.constant dense<0.000000e+00> : vector<8x256xf32>
    %3 = tpu.matmul %0, %2, %cst {dimension_numbers = #tpu.dot_dimension_numbers<[1], [0], [0], [1], [0, 0, 1, 1], [], []>} : vector<8x4xf32>, vector<4x256xf32>, vector<8x256xf32> -> vector<8x256xf32>
    %c0_4 = arith.constant 0 : index
    %c0_5 = arith.constant 0 : index
    %c0_6 = arith.constant 0 : index
    %4 = vector.load %arg4[%c0_4, %c0_5, %c0_6] : memref<1x8x256xf32, #tpu.memory_space<vmem>>, vector<1x8x256xf32>
    %5 = vector.shape_cast %4 : vector<1x8x256xf32> to vector<8x256xf32>
    %6 = vector.shape_cast %3 : vector<8x256xf32> to vector<1x8x256xf32>
    tpu.vector_store %arg4[%c0_4, %c0_5, %c0_6], %6 {strides = array<i32>} : memref<1x8x256xf32, #tpu.memory_space<vmem>>, vector<1x8x256xf32>,
    return
  }
  func.func @transform_0(%arg0: i32, %arg1: i32) -> (i32, i32) {
    %c0_i32 = arith.constant 0 : i32
    %c0_i32_0 = arith.constant 0 : i32
    %c0_i32_1 = arith.constant 0 : i32
    return %c0_i32, %c0_i32_0 : i32, i32
  }
  func.func @transform_1(%arg0: i32, %arg1: i32) -> (i32, i32, i32) {
    %c0_i32 = arith.constant 0 : i32
    %c0_i32_0 = arith.constant 0 : i32
    return %arg0, %c0_i32, %arg1 : i32, i32, i32
  }
  func.func @transform_2(%arg0: i32, %arg1: i32) -> (i32, i32, i32) {
    %c0_i32 = arith.constant 0 : i32
    %c0_i32_0 = arith.constant 0 : i32
    return %arg0, %c0_i32, %arg1 : i32, i32, i32
  }
}

</mosaic_0001>

<llo_original>
// kernel: tpu_custom_call.1
$region0: #{tpu_custom_call.1}
  #allocation0 [shape = 'u32[]', space=smem, size = 0x4, offset = 0x4, fixed_abs, tag = 'smem constant byte address 0x4 - core index']
  #allocation1 [shape = 'u32[144,128]{1,0:T(1,128)}', space=vmem, size = 0x12000, scoped, tag = 'internal scratch']
  %s0 = inlined_call_operand.vmem [shape: f32[8,4], index: 0, kind: input, shape index: {}]
  %s1 = inlined_call_operand.hbm [shape: f32[2,4,256], index: 1, kind: input, shape index: {}]
  %s2 = inlined_call_operand.hbm [shape: f32[2,8,256], index: 2, kind: output, shape index: {}]
  %s3 = sld [smem:[#allocation0]]
  $region45: #{tpu_custom_call.1} parent=0
    _
  %s5 = ssub.s32 1, %s3
  %s6 = scalar_select 0, %s5, %s3
  $region1: #{tpu_custom_call.1} parent=0
    #allocation2 [shape = 'u8[8192]{0}', space=vmem, size = 0x2000, scoped, tag = 'input window, operand 1']
    #allocation3 [shape = 's32[2]{0}', space=sflag, size = 0x8, scoped, tag = 'scoped memory for tpu_custom_call.1']
    #allocation4 [shape = 's32[2]{0}', space=sflag, size = 0x8, scoped, tag = 'scoped memory for tpu_custom_call.1']
    #allocation5 [shape = 'u8[16384]{0}', space=vmem, size = 0x4000, scoped, tag = 'output window, operand 0']
    %7 = vsyncpa [#allocation3], 0
    %s8 = scalar_lea.sflag [#allocation3], 1
    %9 = vsyncpa %s8, 0
    %10 = vsyncpa [#allocation4], 0
    %s11 = scalar_lea.sflag [#allocation4], 1
    %12 = vsyncpa %s11, 0
    loop: start=0, step=1, limit=4
    $region2: #{tpu_custom_call.1} parent=1 // loop_pre_header
      _
    $region3: #{tpu_custom_call.1} parent=1 // loop_header
      %s14 = sphi 0, %s18
      %p15 = scmp.ge.s32.totalorder %s14, 4
      %s21 = sphi 0, %s33
      %s22 = sphi 0, %s29
      %s23 = sphi 0, %s21
      %s24 = sphi 0, %s22
      %s25 = sphi 0, %s23
      %s26 = sphi 0, %s24
      %s34 = sphi 0, %s34
      %s36 = sphi 0, %s34
      %s37 = sphi 0, %s36
      %s51 = sphi 0, %s37
      %s59 = sphi 0, %s61
      %s62 = sphi 0, %s59
      %s63 = sphi 0, %s62
      %s79 = sphi 0, %s63
      %s87 = sphi 0, %s89
      %s90 = sphi 0, %s87
      %s91 = sphi 0, %s90
      %s107 = sphi 0, %s91
    $region4: #{tpu_custom_call.1} parent=1 // loop_header_branch
      %17 = sbr.rel (%p15) target = $region8
    $region5: #{tpu_custom_call.1} parent=1 // loop_body
      %s19 = ssub.s32 %s14, 1
      %s20 = ssub.s32 %s14, 2
      %s27 = sadd.s32 1, %s22
      %p28 = scmp.ge.s32.totalorder %s27, 1
      %s29 = scalar_select %p28, 0, %s27
      %s30 = sadd.s32 1, %s21
      %s31 = scalar_select %p28, %s30, %s21
      %p32 = scmp.ge.s32.totalorder %s31, 2
      %s33 = scalar_select %p32, 0, %s31
      %s35 = sadd.s32 %s34, 1
      %p38 = scmp.eq.s32.totalorder %s14, 1
      %p39 = scmp.ne.s32.totalorder %s34, %s36
      %p40 = scmp.eq.s32.totalorder %s14, 0
      %p41 = por %p39, %p40
      %p42 = scmp.ne.s32.totalorder %s34, %s36
      %p43 = scmp.eq.s32.totalorder %s19, 1
      %p44 = por %p42, %p43
      %p45 = scmp.ne.s32.totalorder %s36, %s37
      %p46 = scmp.eq.s32.totalorder %s19, 0
      %p47 = por %p45, %p46
      %p48 = scmp.ne.s32.totalorder %s36, %s37
      %p49 = scmp.eq.s32.totalorder %s20, 1
      %p50 = por %p48, %p49
      %p52 = scmp.ne.s32.totalorder %s37, %s51
      %p53 = scmp.eq.s32.totalorder %s20, 0
      %p54 = por %p52, %p53
      %s55 = ssub.s32 %s21, %s33
      %s56 = ssub.s32 %s22, %s29
      %s57 = sor.u32 %s55, %s56
      %p58 = scmp.eq.s32.totalorder %s57, 0
      %s60 = sadd.s32 %s59, 1
      %s61 = scalar_select %p58, %s59, %s60
      %p64 = pneg %p58
      %p65 = scmp.eq.s32.totalorder %s14, 1
      %p66 = por %p64, %p65
      %p67 = scmp.ne.s32.totalorder %s59, %s62
      %p68 = scmp.eq.s32.totalorder %s14, 0
      %p69 = por %p67, %p68
      %p70 = scmp.ne.s32.totalorder %s59, %s62
      %p71 = scmp.eq.s32.totalorder %s19, 1
      %p72 = por %p70, %p71
      %p73 = scmp.ne.s32.totalorder %s62, %s63
      %p74 = scmp.eq.s32.totalorder %s19, 0
      %p75 = por %p73, %p74
      %p76 = scmp.ne.s32.totalorder %s62, %s63
      %p77 = scmp.eq.s32.totalorder %s20, 1
      %p78 = por %p76, %p77
      %p80 = scmp.ne.s32.totalorder %s63, %s79
      %p81 = scmp.eq.s32.totalorder %s20, 0
      %p82 = por %p80, %p81
      %s83 = ssub.s32 %s21, %s33
      %s84 = ssub.s32 %s22, %s29
      %s85 = sor.u32 %s83, %s84
      %p86 = scmp.eq.s32.totalorder %s85, 0
      %s88 = sadd.s32 %s87, 1
      %s89 = scalar_select %p86, %s87, %s88
      %p92 = pneg %p86
      %p93 = scmp.eq.s32.totalorder %s14, 1
      %p94 = por %p92, %p93
      %p95 = scmp.ne.s32.totalorder %s87, %s90
      %p96 = scmp.eq.s32.totalorder %s14, 0
      %p97 = por %p95, %p96
      %p98 = scmp.ne.s32.totalorder %s87, %s90
      %p99 = scmp.eq.s32.totalorder %s19, 1
      %p100 = por %p98, %p99
      %p101 = scmp.ne.s32.totalorder %s90, %s91
      %p102 = scmp.eq.s32.totalorder %s19, 0
      %p103 = por %p101, %p102
      %p104 = scmp.ne.s32.totalorder %s90, %s91
      %p105 = scmp.eq.s32.totalorder %s20, 1
      %p106 = por %p104, %p105
      %p108 = scmp.ne.s32.totalorder %s91, %s107
      %p109 = scmp.eq.s32.totalorder %s20, 0
      %p110 = por %p108, %p109
      %p111 = scmp.le.s32.totalorder 1, %s14
      %p112 = scmp.lt.s32.totalorder %s14, 3
      %p113 = pnand %p111, %p112
      %p114 = pneg %p113
      // Predicated region
      $region9: #{tpu_custom_call.1} parent=5 // pred_check
        _
      $region10: #{tpu_custom_call.1} parent=5 // pred_check_branch
        %116 = sbr.rel (%p113) target = $region12
      $region11: #{tpu_custom_call.1} parent=5 // pred_region
        %s117 = ssub.s32 %s14, 1
        // Predicated region
        $region13: #{tpu_custom_call.1} parent=11 // pred_check
          %p118 = pneg %p47
        $region14: #{tpu_custom_call.1} parent=11 // pred_check_branch
          %120 = sbr.rel (%p118) target = $region16
        $region15: #{tpu_custom_call.1} parent=11 // pred_region
          _
        $region16: #{tpu_custom_call.1} parent=11 // pred_fallthru
          _
      $region12: #{tpu_custom_call.1} parent=5 // pred_fallthru
        _
      %p121 = scmp.lt.s32.totalorder %s14, 2
      // Predicated region
      $region17: #{tpu_custom_call.1} parent=5 // pred_check
        %p122 = pneg %p121
      $region18: #{tpu_custom_call.1} parent=5 // pred_check_branch
        %124 = sbr.rel (%p122) target = $region20
      $region19: #{tpu_custom_call.1} parent=5 // pred_region
        // Predicated region
        $region21: #{tpu_custom_call.1} parent=19 // pred_check
          %p125 = pneg %p69
        $region22: #{tpu_custom_call.1} parent=19 // pred_check_branch
          %127 = sbr.rel (%p125) target = $region24
        $region23: #{tpu_custom_call.1} parent=19 // pred_region
          %s128 = sand.u32 %s59, 1
          %s129 = scalar_lea.sflag [#allocation3], %s128
          %s130 = sand.u32 %s59, 1
          %s131 = smul.addr %s130, 8
          %s132 = scalar_lea.vmem [#allocation2], %s131
          %s133 = smul.u32 2, %s22
          %s135 = ssub.s32 128, 128
          %136 = vsyncadd %s129, %s135
          %s137 = smul.addr %s21, 2
          %s138 = sadd.s32 %s133, %s137
          %s139 = smul.addr %s138, 64
          %s140 = scalar_lea.hbm %s1, %s139
          %s142 = sshll.u32 %s132, 4
          %s143 = int_to_ptr.vmem [resolvable:$true] %s142
          %145 = dma.hbm_to_vmem [thread:$0]  %s140, 128, %s143, %s129
        $region24: #{tpu_custom_call.1} parent=19 // pred_fallthru
          _
      $region20: #{tpu_custom_call.1} parent=5 // pred_fallthru
        _
      %p146 = scmp.le.s32.totalorder 1, %s14
      %p147 = scmp.lt.s32.totalorder %s14, 3
      %p148 = pnand %p146, %p147
      %p149 = pneg %p148
      // Predicated region
      $region25: #{tpu_custom_call.1} parent=5 // pred_check
        _
      $region26: #{tpu_custom_call.1} parent=5 // pred_check_branch
        %151 = sbr.rel (%p148) target = $region28
      $region27: #{tpu_custom_call.1} parent=5 // pred_region
        %s152 = ssub.s32 %s14, 1
        %s153 = sand.u32 %s62, 1
        %s154 = scalar_lea.sflag [#allocation3], %s153
        %s155 = sand.u32 %s62, 1
        %s156 = smul.addr %s155, 8
        %s157 = scalar_lea.vmem [#allocation2], %s156
        // Predicated region
        $region29: #{tpu_custom_call.1} parent=27 // pred_check
          %p158 = pneg %p75
        $region30: #{tpu_custom_call.1} parent=27 // pred_check_branch
          %160 = sbr.rel (%p158) target = $region32
        $region31: #{tpu_custom_call.1} parent=27 // pred_region
          %161 = dma.done %s154, 128
        $region32: #{tpu_custom_call.1} parent=27 // pred_fallthru
          _
        %p162 = pneg %p47
        %p163 = pneg %p44
        %s164 = sand.u32 %s62, 1
        %s165 = scalar_lea.sflag [#allocation3], %s164
        %s166 = sand.u32 %s62, 1
        %s167 = smul.addr %s166, 8
        %s168 = scalar_lea.vmem [#allocation2], %s167
        %p169 = pneg %p75
        %p170 = pneg %p72
        %p171 = pneg %p103
        %p172 = pneg %p100
        %s173 = sand.u32 %s90, 1
        %s174 = scalar_lea.sflag [#allocation4], %s173
        %s175 = sand.u32 %s90, 1
        %s176 = smul.addr %s175, 16
        %s177 = scalar_lea.vmem [#allocation5], %s176
        %s178 = smul.u32 2, %s24
        %s179 = smul.u32 2, %s24
        %v180 = vld [vmem:[%s0] sm:$0xff]
        %v181 = vld [vmem:[%s157] sm:$0xff]
        %v183 = vcombine.high %v181, %v181
        %vm184 = vcmask 31744
        %v186 = vsel %vm184, %v180, 0
        %vm188 = vcmask 1043456
        %v189 = vsel %vm188, %v181, 0
        %v191 = vsel %vm188, %v183, 0
        %193 = vmatprep.subr.mxu0 %v191
        %194 = vmatpush1.msra.mxu0 %v189
        %195 = vmatprep.subr.mxu0 0.0
        %196 = vmatpush1.msra.mxu0 0.0
        %197 = vmatprep.subr.mxu0 0.0
        %198 = vmatpush1.msra.mxu0 0.0
        %199 = vmatprep.subr.mxu0 0.0
        %200 = vmatpush1.msra.mxu0 0.0
        %201 = vmatprep.subr.mxu0 0.0
        %202 = vmatpush1.msra.mxu0 0.0
        %203 = vmatprep.subr.mxu0 0.0
        %204 = vmatpush1.msra.mxu0 0.0
        %205 = vmatprep.subr.mxu0 0.0
        %206 = vmatpush1.msra.mxu0 0.0
        %207 = vmatprep.subr.mxu0 0.0
        %208 = vmatpush1.msra.mxu0 0.0
        %209 = vmatprep.subr.mxu0 0.0
        %210 = vmatpush1.msra.mxu0 0.0
        %211 = vmatprep.subr.mxu0 0.0
        %212 = vmatpush1.msra.mxu0 0.0
        %213 = vmatprep.subr.mxu0 0.0
        %214 = vmatpush1.msra.mxu0 0.0
        %215 = vmatprep.subr.mxu0 0.0
        %216 = vmatpush1.msra.mxu0 0.0
        %217 = vmatprep.subr.mxu0 0.0
        %218 = vmatpush1.msra.mxu0 0.0
        %219 = vmatprep.subr.mxu0 0.0
        %220 = vmatpush1.msra.mxu0 0.0
        %221 = vmatprep.subr.mxu0 0.0
        %222 = vmatpush1.msra.mxu0 0.0
        %223 = vmatprep.subr.mxu0 0.0
        %224 = vmatpush1.msra.mxu0 0.0
        %225 = vmatprep.subr.mxu0 0.0
        %226 = vmatpush1.msra.mxu0 0.0
        %227 = vmatprep.subr.mxu0 0.0
        %228 = vmatpush1.msra.mxu0 0.0
        %229 = vmatprep.subr.mxu0 0.0
        %230 = vmatpush1.msra.mxu0 0.0
        %231 = vmatprep.subr.mxu0 0.0
        %232 = vmatpush1.msra.mxu0 0.0
        %233 = vmatprep.subr.mxu0 0.0
        %234 = vmatpush1.msra.mxu0 0.0
        %235 = vmatprep.subr.mxu0 0.0
        %236 = vmatpush1.msra.mxu0 0.0
        %237 = vmatprep.subr.mxu0 0.0
        %238 = vmatpush1.msra.mxu0 0.0
        %239 = vmatprep.subr.mxu0 0.0
        %240 = vmatpush1.msra.mxu0 0.0
        %241 = vmatprep.subr.mxu0 0.0
        %242 = vmatpush1.msra.mxu0 0.0
        %243 = vmatprep.subr.mxu0 0.0
        %244 = vmatpush1.msra.mxu0 0.0
        %245 = vmatprep.subr.mxu0 0.0
        %246 = vmatpush1.msra.mxu0 0.0
        %247 = vmatprep.subr.mxu0 0.0
        %248 = vmatpush1.msra.mxu0 0.0
        %249 = vmatprep.subr.mxu0 0.0
        %250 = vmatpush1.msra.mxu0 0.0
        %251 = vmatprep.subr.mxu0 0.0
        %252 = vmatpush1.msra.mxu0 0.0
        %253 = vmatprep.subr.mxu0 0.0
        %254 = vmatpush1.msra.mxu0 0.0
        %255 = vmatprep.subr.mxu0 0.0
        %256 = vmatpush1.msra.mxu0 0.0
        %257 = vmatprep.mubr.f32.mxu0 0.0
        %258 = vmatmul.mubr.f32.gmra.mrb[0].mxu0 %v186
        %v259 = vpop.f32.mrb[0].mxu0
        %v260 = vadd.f32 0.0, %v259
        %v261 = vpop.f32.mrb[0].mxu0
        %v262 = vadd.f32 0.0, %v261
        %263 = vdwg.mxu0
        %264 = vst [vmem:[%s177] sm:$0xff] %v260
        %265 = vst [vmem:[%s177 + $0x8] sm:$0xff] %v262
        %s266 = sand.u32 %s90, 1
        %s267 = scalar_lea.sflag [#allocation4], %s266
        %s268 = sand.u32 %s90, 1
        %s269 = smul.addr %s268, 16
        %s270 = scalar_lea.vmem [#allocation5], %s269
        // Predicated region
        $region33: #{tpu_custom_call.1} parent=27 // pred_check
          %p271 = pneg %p100
        $region34: #{tpu_custom_call.1} parent=27 // pred_check_branch
          %273 = sbr.rel (%p271) target = $region36
        $region35: #{tpu_custom_call.1} parent=27 // pred_region
          %s274 = smul.u32 2, %s24
          %s276 = ssub.s32 256, 256
          %277 = vsyncadd %s267, %s276
          %s278 = smul.addr %s23, 2
          %s279 = sadd.s32 %s274, %s278
          %s280 = smul.addr %s279, 128
          %s281 = scalar_lea.hbm %s2, %s280
          %s283 = sshll.u32 %s270, 4
          %s284 = int_to_ptr.vmem [resolvable:$true] %s283
          %286 = dma.vmem_to_hbm [thread:$0]  %s284, 256, %s281, %s267
        $region36: #{tpu_custom_call.1} parent=27 // pred_fallthru
          _
      $region28: #{tpu_custom_call.1} parent=5 // pred_fallthru
        _
      %p287 = scmp.le.s32.totalorder 2, %s14
      // Predicated region
      $region37: #{tpu_custom_call.1} parent=5 // pred_check
        %p288 = pneg %p287
      $region38: #{tpu_custom_call.1} parent=5 // pred_check_branch
        %290 = sbr.rel (%p288) target = $region40
      $region39: #{tpu_custom_call.1} parent=5 // pred_region
        %s291 = ssub.s32 %s14, 2
        // Predicated region
        $region41: #{tpu_custom_call.1} parent=39 // pred_check
          %p292 = pneg %p106
        $region42: #{tpu_custom_call.1} parent=39 // pred_check_branch
          %294 = sbr.rel (%p292) target = $region44
        $region43: #{tpu_custom_call.1} parent=39 // pred_region
          %s295 = sand.u32 %s91, 1
          %s296 = scalar_lea.sflag [#allocation4], %s295
          %s297 = sand.u32 %s91, 1
          %s298 = smul.addr %s297, 16
          %s299 = scalar_lea.vmem [#allocation5], %s298
          %300 = dma.done %s296, 256
        $region44: #{tpu_custom_call.1} parent=39 // pred_fallthru
          _
      $region40: #{tpu_custom_call.1} parent=5 // pred_fallthru
        _
    $region6: #{tpu_custom_call.1} parent=1 // loop_footer
      %s18 = sadd.s32 1, %s14
    $region7: #{tpu_custom_call.1} parent=1 // loop_footer_branch
      %13 = sbr.rel target = $region3
    $region8: #{tpu_custom_call.1} parent=1 // loop_exit
      _
    %301 = vsyncpa [#allocation3], 1
    %s302 = scalar_lea.sflag [#allocation3], 1
    %303 = vsyncpa %s302, 1
    %304 = vsyncpa [#allocation4], 1
    %s305 = scalar_lea.sflag [#allocation4], 1
    %306 = vsyncpa %s305, 1

</llo_original>
